<compile_context>
chip_gen: v5e
topology: v5e:2x2
jax: 0.10.0
libtpu: 0.0.40
codegen_flags: <defaults>
</compile_context>

<pallas_src>
import jax
import jax.numpy as jnp
from jax.experimental import pallas as pl
from jax.experimental.pallas import tpu as pltpu

_COMPUTE_DTYPE = jnp.bfloat16  # MXU operand dtype (f32 accumulation)


def _round_up(x, m):
    return ((x + m - 1) // m) * m


def _pack_linear(w, b, in_pad, out_pad, dtype):
    """Pack (in, out) weight + (out,) bias into a (in_pad + 8, out_pad) slab.

    Rows [0:in)        -> weight (zero padded to in_pad / out_pad)
    Row  [in_pad]      -> bias   (zero padded to out_pad)
    The +8 keeps the bias row in its own sublane tile.
    """
    fan_in, fan_out = w.shape
    slab = jnp.zeros((in_pad + 8, out_pad), dtype)
    slab = slab.at[:fan_in, :fan_out].set(w.astype(dtype))
    slab = slab.at[in_pad, :fan_out].set(b.astype(dtype))
    return slab


def network_forward(x, params, *, tile_b=512):
    """Forward pass of the DQN MLP.  params: w1,b1,w2,b2,w3,b3 with weights
    stored as (in_features, out_features) and biases as (out_features,)."""
    w1, b1 = params["w1"], params["b1"]
    w2, b2 = params["w2"], params["b2"]
    w3, b3 = params["w3"], params["b3"]

    B, state_dim = x.shape
    H = w1.shape[1]
    A = w3.shape[1]
    cdt = _COMPUTE_DTYPE

    # Lane-dense padded dimensions (multiples of 128).
    SP = _round_up(state_dim, 128)
    HP = _round_up(H, 128)
    AP = _round_up(A, 128)

    # Batch tiling: multiple of 8 sublanes, capped so the pipelined footprint
    # (2 x-tiles + 2 out-tiles + resident weights) stays well under the scoped
    # VMEM limit on every chip (< 2 MiB at tile_b=512 with these widths).
    TILE_B = min(tile_b, _round_up(B, 8))
    B_pad = _round_up(B, TILE_B)

    # Zero-padded / packed operands (zero padding is exact for the matmul).
    x_p = jnp.zeros((B_pad, SP), cdt).at[:B, :state_dim].set(x.astype(cdt))
    w1s = _pack_linear(w1, b1, SP, HP, cdt)
    w2s = _pack_linear(w2, b2, HP, HP, cdt)
    w3s = _pack_linear(w3, b3, HP, AP, cdt)

    def kernel(x_ref, w1_ref, w2_ref, w3_ref, out_ref):
        def layer(h, w_ref, in_pad):
            w = w_ref[0:in_pad, :]                                  # static, tile-aligned view
            b = w_ref[in_pad:in_pad + 1, :].astype(jnp.float32)     # (1, out) bias row
            return jnp.dot(h, w, preferred_element_type=jnp.float32) + b

        h = x_ref[...]
        h = jnp.maximum(layer(h, w1_ref, SP), 0.0).astype(cdt)      # ReLU in f32, bf16 MXU feed
        h = jnp.maximum(layer(h, w2_ref, HP), 0.0).astype(cdt)
        out_ref[...] = layer(h, w3_ref, HP).astype(out_ref.dtype)   # logits, f32, lane-dense

    out = pl.pallas_call(
        kernel,
        out_shape=jax.ShapeDtypeStruct((B_pad, AP), jnp.float32),
        grid=(B_pad // TILE_B,),
        in_specs=[
            pl.BlockSpec((TILE_B, SP), lambda i: (i, 0)),           # batch-tiled activations
            pl.BlockSpec((SP + 8, HP), lambda i: (0, 0)),           # resident weight+bias slabs
            pl.BlockSpec((HP + 8, HP), lambda i: (0, 0)),
            pl.BlockSpec((HP + 8, AP), lambda i: (0, 0)),
        ],
        out_specs=pl.BlockSpec((TILE_B, AP), lambda i: (i, 0)),
        compiler_params=pltpu.CompilerParams(
            dimension_semantics=("parallel",),                      # megacore split on v7x
        ),
    )(x_p, w1s, w2s, w3s)

    return out[:B, :A]


def init_params(key, state_dim, action_dim, hidden_layer=128):
    """Mimic PyTorch nn.Linear default init: U(-1/sqrt(fan_in), 1/sqrt(fan_in)).
    Weights are stored as (in, out) so the kernel computes x @ W + b."""
    def linear(k, fan_in, fan_out):
        kw, kb = jax.random.split(k)
        bound = 1.0 / jnp.sqrt(jnp.float32(fan_in))
        w = jax.random.uniform(kw, (fan_in, fan_out), jnp.float32, -bound, bound)
        b = jax.random.uniform(kb, (fan_out,), jnp.float32, -bound, bound)
        return w, b

    k1, k2, k3 = jax.random.split(key, 3)
    w1, b1 = linear(k1, state_dim, hidden_layer)
    w2, b2 = linear(k2, hidden_layer, hidden_layer)
    w3, b3 = linear(k3, hidden_layer, action_dim)
    return {"w1": w1, "b1": b1, "w2": w2, "b2": b2, "w3": w3, "b3": b3}


def ref_forward(x, params):
    """Plain-JAX reference with the same bf16-operand / f32-accum recipe."""
    cdt = _COMPUTE_DTYPE

    def lin(h, w, b):
        return (jnp.dot(h.astype(cdt), w.astype(cdt),
                        preferred_element_type=jnp.float32)
                + b.astype(cdt).astype(jnp.float32))

    h1 = jnp.maximum(lin(x, params["w1"], params["b1"]), 0.0)
    h2 = jnp.maximum(lin(h1, params["w2"], params["b2"]), 0.0)
    return lin(h2, params["w3"], params["b3"])


if __name__ == "__main__":
    # Small shapes consistent with the module (hidden_layer default = 128).
    batch, state_dim, hidden, action_dim = 8, 16, 128, 8

    key = jax.random.PRNGKey(0)
    k_params, k_x, k_x2 = jax.random.split(key, 3)
    params = init_params(k_params, state_dim, action_dim, hidden_layer=hidden)
    x = jax.random.normal(k_x, (batch, state_dim), jnp.float32)

    logits = network_forward(x, params)
    jax.block_until_ready(logits)

    expected = ref_forward(x, params)
    assert logits.shape == (batch, action_dim)
    assert jnp.allclose(logits, expected, atol=2e-3, rtol=2e-3), float(
        jnp.max(jnp.abs(logits - expected)))

    # Second check: larger, non-multiple batch exercising grid > 1 and padding.
    x_big = jax.random.normal(k_x2, (1029, state_dim), jnp.float32)
    logits_big = network_forward(x_big, params, tile_b=256)
    jax.block_until_ready(logits_big)
    expected_big = ref_forward(x_big, params)
    assert logits_big.shape == (1029, action_dim)
    assert jnp.allclose(logits_big, expected_big, atol=2e-3, rtol=2e-3), float(
        jnp.max(jnp.abs(logits_big - expected_big)))

    print("KERNEL_OK")
</pallas_src>

<mosaic_0001>
module attributes {stable_mosaic.version = 11 : i64} {
  func.func @kernel(%arg0: i32, %arg1: memref<8x128xbf16, #tpu.memory_space<vmem>>, %arg2: memref<136x128xbf16, #tpu.memory_space<vmem>>, %arg3: memref<136x128xbf16, #tpu.memory_space<vmem>>, %arg4: memref<136x128xbf16, #tpu.memory_space<vmem>>, %arg5: memref<8x128xf32, #tpu.memory_space<vmem>>) attributes {dimension_semantics = [#tpu.dimension_semantics<parallel>], iteration_bounds = array<i64: 1>, scalar_prefetch = 0 : i64, scratch_operands = 0 : i64, tpu.core_type = #tpu.core_type<tc>, window_params = [{transform_indices = @transform_0, window_bounds = array<i64: 8, 128>}, {pipeline_mode = #tpu.pipeline_mode<synchronous>, transform_indices = @transform_1, window_bounds = array<i64: 136, 128>}, {pipeline_mode = #tpu.pipeline_mode<synchronous>, transform_indices = @transform_2, window_bounds = array<i64: 136, 128>}, {pipeline_mode = #tpu.pipeline_mode<synchronous>, transform_indices = @transform_3, window_bounds = array<i64: 136, 128>}, {transform_indices = @transform_4, window_bounds = array<i64: 8, 128>}]} {
    %c0 = arith.constant 0 : index
    %c0_0 = arith.constant 0 : index
    %0 = vector.load %arg1[%c0, %c0_0] : memref<8x128xbf16, #tpu.memory_space<vmem>>, vector<8x128xbf16>
    %c0_1 = arith.constant 0 : index
    %c0_2 = arith.constant 0 : index
    %1 = vector.load %arg2[%c0_1, %c0_2] : memref<136x128xbf16, #tpu.memory_space<vmem>>, vector<128x128xbf16>
    %c128 = arith.constant 128 : index
    %c0_3 = arith.constant 0 : index
    %2 = vector.load %arg2[%c128, %c0_3] : memref<136x128xbf16, #tpu.memory_space<vmem>>, vector<1x128xbf16>
    %3 = arith.extf %2 : vector<1x128xbf16> to vector<1x128xf32>
    %cst = arith.constant dense<0.000000e+00> : vector<8x128xf32>
    %4 = tpu.matmul %0, %1, %cst {dimension_numbers = #tpu.dot_dimension_numbers<[1], [0], [0], [1], [0, 0, 1, 1], [], []>} : vector<8x128xbf16>, vector<128x128xbf16>, vector<8x128xf32> -> vector<8x128xf32>
    %5 = vector.broadcast %3 : vector<1x128xf32> to vector<8x128xf32>
    %6 = arith.addf %4, %5 : vector<8x128xf32>
    %cst_4 = arith.constant 0.000000e+00 : f32
    %7 = vector.broadcast %cst_4 : f32 to vector<8x128xf32>
    %8 = arith.maximumf %6, %7 : vector<8x128xf32>
    %9 = arith.truncf %8 : vector<8x128xf32> to vector<8x128xbf16>
    %c0_5 = arith.constant 0 : index
    %c0_6 = arith.constant 0 : index
    %10 = vector.load %arg3[%c0_5, %c0_6] : memref<136x128xbf16, #tpu.memory_space<vmem>>, vector<128x128xbf16>
    %c128_7 = arith.constant 128 : index
    %c0_8 = arith.constant 0 : index
    %11 = vector.load %arg3[%c128_7, %c0_8] : memref<136x128xbf16, #tpu.memory_space<vmem>>, vector<1x128xbf16>
    %12 = arith.extf %11 : vector<1x128xbf16> to vector<1x128xf32>
    %cst_9 = arith.constant dense<0.000000e+00> : vector<8x128xf32>
    %13 = tpu.matmul %9, %10, %cst_9 {dimension_numbers = #tpu.dot_dimension_numbers<[1], [0], [0], [1], [0, 0, 1, 1], [], []>} : vector<8x128xbf16>, vector<128x128xbf16>, vector<8x128xf32> -> vector<8x128xf32>
    %14 = vector.broadcast %12 : vector<1x128xf32> to vector<8x128xf32>
    %15 = arith.addf %13, %14 : vector<8x128xf32>
    %cst_10 = arith.constant 0.000000e+00 : f32
    %16 = vector.broadcast %cst_10 : f32 to vector<8x128xf32>
    %17 = arith.maximumf %15, %16 : vector<8x128xf32>
    %18 = arith.truncf %17 : vector<8x128xf32> to vector<8x128xbf16>
    %c0_11 = arith.constant 0 : index
    %c0_12 = arith.constant 0 : index
    %19 = vector.load %arg4[%c0_11, %c0_12] : memref<136x128xbf16, #tpu.memory_space<vmem>>, vector<128x128xbf16>
    %c128_13 = arith.constant 128 : index
    %c0_14 = arith.constant 0 : index
    %20 = vector.load %arg4[%c128_13, %c0_14] : memref<136x128xbf16, #tpu.memory_space<vmem>>, vector<1x128xbf16>
    %21 = arith.extf %20 : vector<1x128xbf16> to vector<1x128xf32>
    %cst_15 = arith.constant dense<0.000000e+00> : vector<8x128xf32>
    %22 = tpu.matmul %18, %19, %cst_15 {dimension_numbers = #tpu.dot_dimension_numbers<[1], [0], [0], [1], [0, 0, 1, 1], [], []>} : vector<8x128xbf16>, vector<128x128xbf16>, vector<8x128xf32> -> vector<8x128xf32>
    %23 = vector.broadcast %21 : vector<1x128xf32> to vector<8x128xf32>
    %24 = arith.addf %22, %23 : vector<8x128xf32>
    %c0_16 = arith.constant 0 : index
    %c0_17 = arith.constant 0 : index
    %25 = vector.load %arg5[%c0_16, %c0_17] : memref<8x128xf32, #tpu.memory_space<vmem>>, vector<8x128xf32>
    tpu.vector_store %arg5[%c0_16, %c0_17], %24 {strides = array<i32>} : memref<8x128xf32, #tpu.memory_space<vmem>>, vector<8x128xf32>,
    return
  }
  func.func @transform_0(%arg0: i32) -> (i32, i32) {
    %c0_i32 = arith.constant 0 : i32
    %c0_i32_0 = arith.constant 0 : i32
    return %arg0, %c0_i32 : i32, i32
  }
  func.func @transform_1(%arg0: i32) -> (i32, i32) {
    %c0_i32 = arith.constant 0 : i32
    %c0_i32_0 = arith.constant 0 : i32
    %c0_i32_1 = arith.constant 0 : i32
    return %c0_i32, %c0_i32_0 : i32, i32
  }
  func.func @transform_2(%arg0: i32) -> (i32, i32) {
    %c0_i32 = arith.constant 0 : i32
    %c0_i32_0 = arith.constant 0 : i32
    %c0_i32_1 = arith.constant 0 : i32
    return %c0_i32, %c0_i32_0 : i32, i32
  }
  func.func @transform_3(%arg0: i32) -> (i32, i32) {
    %c0_i32 = arith.constant 0 : i32
    %c0_i32_0 = arith.constant 0 : i32
    %c0_i32_1 = arith.constant 0 : i32
    return %c0_i32, %c0_i32_0 : i32, i32
  }
  func.func @transform_4(%arg0: i32) -> (i32, i32) {
    %c0_i32 = arith.constant 0 : i32
    %c0_i32_0 = arith.constant 0 : i32
    return %arg0, %c0_i32 : i32, i32
  }
}

</mosaic_0001>

<llo_original>
// kernel: tpu_custom_call.1
$region0: #{tpu_custom_call.1}
  #allocation0 [shape = 'u32[]', space=smem, size = 0x4, offset = 0x4, fixed_abs, tag = 'smem constant byte address 0x4 - core index']
  #allocation1 [shape = 'u32[72,128]{1,0:T(1,128)}', space=vmem, size = 0x9000, scoped, tag = 'internal scratch']
  %s0 = inlined_call_operand.hbm [shape: bf16[8,128], index: 0, kind: input, shape index: {}]
  %s1 = inlined_call_operand.hbm [shape: bf16[136,128], index: 1, kind: input, shape index: {}]
  %s2 = inlined_call_operand.hbm [shape: bf16[136,128], index: 2, kind: input, shape index: {}]
  %s3 = inlined_call_operand.hbm [shape: bf16[136,128], index: 3, kind: input, shape index: {}]
  %s4 = inlined_call_operand.hbm [shape: f32[8,128], index: 4, kind: output, shape index: {}]
  %s5 = sld [smem:[#allocation0]]
  $region42: #{tpu_custom_call.1} parent=0
    _
  %s7 = ssub.s32 1, %s5
  %s8 = scalar_select 0, %s7, %s5
  $region1: #{tpu_custom_call.1} parent=0
    #allocation2 [shape = 'u8[2048]{0}', space=vmem, size = 0x800, scoped, tag = 'input window, operand 0, single buffered']
    #allocation3 [shape = 's32[1]{0}', space=sflag, size = 0x4, scoped, tag = 'scoped memory for tpu_custom_call.1']
    #allocation4 [shape = 's32[1]{0}', space=sflag, size = 0x4, scoped, tag = 'scoped memory for tpu_custom_call.1']
    #allocation5 [shape = 'u8[34816]{0}', space=vmem, size = 0x8800, scoped, tag = 'input window, operand 1, single buffered']
    #allocation6 [shape = 's32[1]{0}', space=sflag, size = 0x4, scoped, tag = 'scoped memory for tpu_custom_call.1']
    #allocation7 [shape = 'u8[34816]{0}', space=vmem, size = 0x8800, scoped, tag = 'input window, operand 2, single buffered']
    #allocation8 [shape = 'u8[34816]{0}', space=vmem, size = 0x8800, scoped, tag = 'input window, operand 3, single buffered']
    #allocation9 [shape = 's32[1]{0}', space=sflag, size = 0x4, scoped, tag = 'scoped memory for tpu_custom_call.1']
    #allocation10 [shape = 'u8[4096]{0}', space=vmem, size = 0x1000, scoped, tag = 'output window, operand 0, single buffered']
    %9 = vsyncpa [#allocation3], 0
    %10 = vsyncpa [#allocation6], 0
    %11 = vsyncpa [#allocation9], 0
    %12 = vsyncpa [#allocation4], 0
    // Predicated region
    $region2: #{tpu_custom_call.1} parent=1 // pred_check
      _
    $region3: #{tpu_custom_call.1} parent=1 // pred_check_branch
      %14 = sbr.rel (0) target = $region5
    $region4: #{tpu_custom_call.1} parent=1 // pred_region
      %16 = vsyncadd [#allocation3], 0
      %s18 = sshll.u32 %s0, 4
      %s19 = int_to_ptr.hbm [resolvable:$true] %s18
      %s20 = sshll.u32 [#allocation2], 4
      %s21 = int_to_ptr.vmem [resolvable:$true] %s20
      %23 = dma.hbm_to_vmem [thread:$0]  %s19, 64, %s21, [#allocation3]
    $region5: #{tpu_custom_call.1} parent=1 // pred_fallthru
      _
    // Predicated region
    $region6: #{tpu_custom_call.1} parent=1 // pred_check
      _
    $region7: #{tpu_custom_call.1} parent=1 // pred_check_branch
      %25 = sbr.rel (0) target = $region9
    $region8: #{tpu_custom_call.1} parent=1 // pred_region
      %27 = vsyncadd [#allocation6], 0
      %s28 = sshll.u32 %s1, 4
      %s29 = int_to_ptr.hbm [resolvable:$true] %s28
      %s30 = sshll.u32 [#allocation5], 4
      %s31 = int_to_ptr.vmem [resolvable:$true] %s30
      %36 = dma.hbm_to_vmem [thread:$0]  %s29, 1088, %s31, [#allocation6], 64, 64, 4
    $region9: #{tpu_custom_call.1} parent=1 // pred_fallthru
      _
    // Predicated region
    $region10: #{tpu_custom_call.1} parent=1 // pred_check
      _
    $region11: #{tpu_custom_call.1} parent=1 // pred_check_branch
      %38 = sbr.rel (0) target = $region13
    $region12: #{tpu_custom_call.1} parent=1 // pred_region
      %40 = vsyncadd [#allocation6], 0
      %s41 = sshll.u32 %s2, 4
      %s42 = int_to_ptr.hbm [resolvable:$true] %s41
      %s43 = sshll.u32 [#allocation7], 4
      %s44 = int_to_ptr.vmem [resolvable:$true] %s43
      %49 = dma.hbm_to_vmem [thread:$0]  %s42, 1088, %s44, [#allocation6], 64, 64, 4
    $region13: #{tpu_custom_call.1} parent=1 // pred_fallthru
      _
    // Predicated region
    $region14: #{tpu_custom_call.1} parent=1 // pred_check
      _
    $region15: #{tpu_custom_call.1} parent=1 // pred_check_branch
      %51 = sbr.rel (0) target = $region17
    $region16: #{tpu_custom_call.1} parent=1 // pred_region
      %53 = vsyncadd [#allocation9], 0
      %s54 = sshll.u32 %s3, 4
      %s55 = int_to_ptr.hbm [resolvable:$true] %s54
      %s56 = sshll.u32 [#allocation8], 4
      %s57 = int_to_ptr.vmem [resolvable:$true] %s56
      %62 = dma.hbm_to_vmem [thread:$0]  %s55, 1088, %s57, [#allocation9], 64, 64, 4
    $region17: #{tpu_custom_call.1} parent=1 // pred_fallthru
      _
    // Predicated region
    $region18: #{tpu_custom_call.1} parent=1 // pred_check
      _
    $region19: #{tpu_custom_call.1} parent=1 // pred_check_branch
      %64 = sbr.rel (0) target = $region21
    $region20: #{tpu_custom_call.1} parent=1 // pred_region
      %66 = dma.done [#allocation3], 64
    $region21: #{tpu_custom_call.1} parent=1 // pred_fallthru
      _
    // Predicated region
    $region22: #{tpu_custom_call.1} parent=1 // pred_check
      _
    $region23: #{tpu_custom_call.1} parent=1 // pred_check_branch
      %68 = sbr.rel (0) target = $region25
    $region24: #{tpu_custom_call.1} parent=1 // pred_region
      %70 = dma.done [#allocation6], 1088
    $region25: #{tpu_custom_call.1} parent=1 // pred_fallthru
      _
    // Predicated region
    $region26: #{tpu_custom_call.1} parent=1 // pred_check
      _
    $region27: #{tpu_custom_call.1} parent=1 // pred_check_branch
      %72 = sbr.rel (0) target = $region29
    $region28: #{tpu_custom_call.1} parent=1 // pred_region
      %74 = dma.done [#allocation6], 1088
    $region29: #{tpu_custom_call.1} parent=1 // pred_fallthru
      _
    // Predicated region
    $region30: #{tpu_custom_call.1} parent=1 // pred_check
      _
    $region31: #{tpu_custom_call.1} parent=1 // pred_check_branch
      %76 = sbr.rel (0) target = $region33
    $region32: #{tpu_custom_call.1} parent=1 // pred_region
      %78 = dma.done [#allocation9], 1088
    $region33: #{tpu_custom_call.1} parent=1 // pred_fallthru
      _
    %v79 = vld [vmem:[#allocation2] sm:$0xf]
    %v80 = vld [vmem:[#allocation5] sm:$0xf]
    %v81 = vld [vmem:[#allocation5 + $0x4] sm:$0xf]
    %v82 = vld [vmem:[#allocation5 + $0x8] sm:$0xf]
    %v83 = vld [vmem:[#allocation5 + $0xc] sm:$0xf]
    %v84 = vld [vmem:[#allocation5 + $0x10] sm:$0xf]
    %v85 = vld [vmem:[#allocation5 + $0x14] sm:$0xf]
    %v86 = vld [vmem:[#allocation5 + $0x18] sm:$0xf]
    %v87 = vld [vmem:[#allocation5 + $0x1c] sm:$0xf]
    %v88 = vld [vmem:[#allocation5 + $0x20] sm:$0xf]
    %v89 = vld [vmem:[#allocation5 + $0x24] sm:$0xf]
    %v90 = vld [vmem:[#allocation5 + $0x28] sm:$0xf]
    %v91 = vld [vmem:[#allocation5 + $0x2c] sm:$0xf]
    %v92 = vld [vmem:[#allocation5 + $0x30] sm:$0xf]
    %v93 = vld [vmem:[#allocation5 + $0x34] sm:$0xf]
    %v94 = vld [vmem:[#allocation5 + $0x38] sm:$0xf]
    %v95 = vld [vmem:[#allocation5 + $0x3c] sm:$0xf]
    %v96 = vld [vmem:[#allocation5 + $0x40] sm:$0x1]
    %v97 = vunpack.c.l.bf16 %v96
    %v98 = vperm.slane %v97, 0
    %v115 = vunpack.c.l.b16 %v80
    %v116 = vunpack.c.l.b16 %v81
    %v117 = vunpack.c.l.b16 %v82
    %v118 = vunpack.c.l.b16 %v83
    %v119 = vunpack.c.l.b16 %v84
    %v120 = vunpack.c.l.b16 %v85
    %v121 = vunpack.c.l.b16 %v86
    %v122 = vunpack.c.l.b16 %v87
    %v123 = vunpack.c.l.b16 %v88
    %v124 = vunpack.c.l.b16 %v89
    %v125 = vunpack.c.l.b16 %v90
    %v126 = vunpack.c.l.b16 %v91
    %v127 = vunpack.c.l.b16 %v92
    %v128 = vunpack.c.l.b16 %v93
    %v129 = vunpack.c.l.b16 %v94
    %v130 = vunpack.c.l.b16 %v95
    %v131 = vpack.c.b16 %v116, %v115
    %v132 = vpack.c.b16 %v118, %v117
    %v133 = vpack.c.b16 %v120, %v119
    %v134 = vpack.c.b16 %v122, %v121
    %v135 = vpack.c.b16 %v124, %v123
    %v136 = vpack.c.b16 %v126, %v125
    %v137 = vpack.c.b16 %v128, %v127
    %v138 = vpack.c.b16 %v130, %v129
    %147 = vmatpush.bf16.msra.mxu0 %v138
    %148 = vmatpush.bf16.msra.mxu0 %v137
    %149 = vmatpush.bf16.msra.mxu0 %v136
    %150 = vmatpush.bf16.msra.mxu0 %v135
    %151 = vmatpush.bf16.msra.mxu0 %v134
    %152 = vmatpush.bf16.msra.mxu0 %v133
    %153 = vmatpush.bf16.msra.mxu0 %v132
    %154 = vmatpush.bf16.msra.mxu0 %v131
    %155 = vmatmul.bf16.gmra.mxu0 %v79
    %v156 = vpop.f32.mrf.mxu0
    %v157 = vadd.f32 %v98, %v156
    %v158 = vpop.f32.mrf.mxu0
    %159 = vdwg.mxu0
    %v160 = vmax.f32 %v157, 0.0
    %v161 = vpack.c.bf16 %v160, %v160
    %v162 = vld [vmem:[#allocation7] sm:$0xf]
    %v163 = vld [vmem:[#allocation7 + $0x4] sm:$0xf]
    %v164 = vld [vmem:[#allocation7 + $0x8] sm:$0xf]
    %v165 = vld [vmem:[#allocation7 + $0xc] sm:$0xf]
    %v166 = vld [vmem:[#allocation7 + $0x10] sm:$0xf]
    %v167 = vld [vmem:[#allocation7 + $0x14] sm:$0xf]
    %v168 = vld [vmem:[#allocation7 + $0x18] sm:$0xf]
    %v169 = vld [vmem:[#allocation7 + $0x1c] sm:$0xf]
    %v170 = vld [vmem:[#allocation7 + $0x20] sm:$0xf]
    %v171 = vld [vmem:[#allocation7 + $0x24] sm:$0xf]
    %v172 = vld [vmem:[#allocation7 + $0x28] sm:$0xf]
    %v173 = vld [vmem:[#allocation7 + $0x2c] sm:$0xf]
    %v174 = vld [vmem:[#allocation7 + $0x30] sm:$0xf]
    %v175 = vld [vmem:[#allocation7 + $0x34] sm:$0xf]
    %v176 = vld [vmem:[#allocation7 + $0x38] sm:$0xf]
    %v177 = vld [vmem:[#allocation7 + $0x3c] sm:$0xf]
    %v178 = vld [vmem:[#allocation7 + $0x40] sm:$0x1]
    %v179 = vunpack.c.l.bf16 %v178
    %v180 = vperm.slane %v179, 0
    %v197 = vunpack.c.l.b16 %v162
    %v198 = vunpack.c.l.b16 %v163
    %v199 = vunpack.c.l.b16 %v164
    %v200 = vunpack.c.l.b16 %v165
    %v201 = vunpack.c.l.b16 %v166
    %v202 = vunpack.c.l.b16 %v167
    %v203 = vunpack.c.l.b16 %v168
    %v204 = vunpack.c.l.b16 %v169
    %v205 = vunpack.c.l.b16 %v170
    %v206 = vunpack.c.l.b16 %v171
    %v207 = vunpack.c.l.b16 %v172
    %v208 = vunpack.c.l.b16 %v173
    %v209 = vunpack.c.l.b16 %v174
    %v210 = vunpack.c.l.b16 %v175
    %v211 = vunpack.c.l.b16 %v176
    %v212 = vunpack.c.l.b16 %v177
    %v213 = vpack.c.b16 %v198, %v197
    %v214 = vpack.c.b16 %v200, %v199
    %v215 = vpack.c.b16 %v202, %v201
    %v216 = vpack.c.b16 %v204, %v203
    %v217 = vpack.c.b16 %v206, %v205
    %v218 = vpack.c.b16 %v208, %v207
    %v219 = vpack.c.b16 %v210, %v209
    %v220 = vpack.c.b16 %v212, %v211
    %229 = vmatpush.bf16.msra.mxu0 %v220
    %230 = vmatpush.bf16.msra.mxu0 %v219
    %231 = vmatpush.bf16.msra.mxu0 %v218
    %232 = vmatpush.bf16.msra.mxu0 %v217
    %233 = vmatpush.bf16.msra.mxu0 %v216
    %234 = vmatpush.bf16.msra.mxu0 %v215
    %235 = vmatpush.bf16.msra.mxu0 %v214
    %236 = vmatpush.bf16.msra.mxu0 %v213
    %237 = vmatmul.bf16.gmra.mxu0 %v161
    %v238 = vpop.f32.mrf.mxu0
    %v239 = vadd.f32 %v180, %v238
    %v240 = vpop.f32.mrf.mxu0
    %241 = vdwg.mxu0
    %v242 = vmax.f32 %v239, 0.0
    %v243 = vpack.c.bf16 %v242, %v242
    %v244 = vld [vmem:[#allocation8] sm:$0xf]
    %v245 = vld [vmem:[#allocation8 + $0x4] sm:$0xf]
    %v246 = vld [vmem:[#allocation8 + $0x8] sm:$0xf]
    %v247 = vld [vmem:[#allocation8 + $0xc] sm:$0xf]
    %v248 = vld [vmem:[#allocation8 + $0x10] sm:$0xf]
    %v249 = vld [vmem:[#allocation8 + $0x14] sm:$0xf]
    %v250 = vld [vmem:[#allocation8 + $0x18] sm:$0xf]
    %v251 = vld [vmem:[#allocation8 + $0x1c] sm:$0xf]
    %v252 = vld [vmem:[#allocation8 + $0x20] sm:$0xf]
    %v253 = vld [vmem:[#allocation8 + $0x24] sm:$0xf]
    %v254 = vld [vmem:[#allocation8 + $0x28] sm:$0xf]
    %v255 = vld [vmem:[#allocation8 + $0x2c] sm:$0xf]
    %v256 = vld [vmem:[#allocation8 + $0x30] sm:$0xf]
    %v257 = vld [vmem:[#allocation8 + $0x34] sm:$0xf]
    %v258 = vld [vmem:[#allocation8 + $0x38] sm:$0xf]
    %v259 = vld [vmem:[#allocation8 + $0x3c] sm:$0xf]
    %v260 = vld [vmem:[#allocation8 + $0x40] sm:$0x1]
    %v261 = vunpack.c.l.bf16 %v260
    %v262 = vperm.slane %v261, 0
    %v279 = vunpack.c.l.b16 %v244
    %v280 = vunpack.c.l.b16 %v245
    %v281 = vunpack.c.l.b16 %v246
    %v282 = vunpack.c.l.b16 %v247
    %v283 = vunpack.c.l.b16 %v248
    %v284 = vunpack.c.l.b16 %v249
    %v285 = vunpack.c.l.b16 %v250
    %v286 = vunpack.c.l.b16 %v251
    %v287 = vunpack.c.l.b16 %v252
    %v288 = vunpack.c.l.b16 %v253
    %v289 = vunpack.c.l.b16 %v254
    %v290 = vunpack.c.l.b16 %v255
    %v291 = vunpack.c.l.b16 %v256
    %v292 = vunpack.c.l.b16 %v257
    %v293 = vunpack.c.l.b16 %v258
    %v294 = vunpack.c.l.b16 %v259
    %v295 = vpack.c.b16 %v280, %v279
    %v296 = vpack.c.b16 %v282, %v281
    %v297 = vpack.c.b16 %v284, %v283
    %v298 = vpack.c.b16 %v286, %v285
    %v299 = vpack.c.b16 %v288, %v287
    %v300 = vpack.c.b16 %v290, %v289
    %v301 = vpack.c.b16 %v292, %v291
    %v302 = vpack.c.b16 %v294, %v293
    %311 = vmatpush.bf16.msra.mxu0 %v302
    %312 = vmatpush.bf16.msra.mxu0 %v301
    %313 = vmatpush.bf16.msra.mxu0 %v300
    %314 = vmatpush.bf16.msra.mxu0 %v299
    %315 = vmatpush.bf16.msra.mxu0 %v298
    %316 = vmatpush.bf16.msra.mxu0 %v297
    %317 = vmatpush.bf16.msra.mxu0 %v296
    %318 = vmatpush.bf16.msra.mxu0 %v295
    %319 = vmatmul.bf16.gmra.mxu0 %v243
    %v320 = vpop.f32.mrf.mxu0
    %v321 = vadd.f32 %v262, %v320
    %v322 = vpop.f32.mrf.mxu0
    %323 = vdwg.mxu0
    %324 = vst [vmem:[#allocation10] sm:$0xff] %v321
    // Predicated region
    $region34: #{tpu_custom_call.1} parent=1 // pred_check
      _
    $region35: #{tpu_custom_call.1} parent=1 // pred_check_branch
      %326 = sbr.rel (0) target = $region37
    $region36: #{tpu_custom_call.1} parent=1 // pred_region
      %328 = vsyncadd [#allocation4], 0
      %s330 = sshll.u32 [#allocation10], 4
      %s331 = int_to_ptr.vmem [resolvable:$true] %s330
      %s332 = sshll.u32 %s4, 4
      %s333 = int_to_ptr.hbm [resolvable:$true] %s332
      %335 = dma.vmem_to_hbm [thread:$0]  %s331, 128, %s333, [#allocation4]
    $region37: #{tpu_custom_call.1} parent=1 // pred_fallthru
      _
    // Predicated region
    $region38: #{tpu_custom_call.1} parent=1 // pred_check
      _
    $region39: #{tpu_custom_call.1} parent=1 // pred_check_branch
      %337 = sbr.rel (0) target = $region41
    $region40: #{tpu_custom_call.1} parent=1 // pred_region
      %339 = dma.done [#allocation4], 128
    $region41: #{tpu_custom_call.1} parent=1 // pred_fallthru
      _
    %340 = vsyncpa [#allocation3], 1
    %341 = vsyncpa [#allocation6], 1
    %342 = vsyncpa [#allocation9], 1
    %343 = vsyncpa [#allocation4], 1

</llo_original>
